<compile_context>
chip_gen: v7x
topology: tpu7x:2x2x1
jax: 0.10.0
libtpu: 0.0.40
codegen_flags: <defaults>
</compile_context>

<pallas_src>
import functools

import jax
import jax.numpy as jnp
from jax import lax
from jax.experimental import pallas as pl
from jax.experimental.pallas import tpu as pltpu


def _im2col(x, masks, ones_row, W):
    """Build the (9*C + 1, S) im2col matrix for a 3x3 conv with zero padding.

    x        : (C, S) activation, channel-major, spatial flattened row-major.
    masks    : (9, 1, S) 0/1 validity masks, tap order t = dy*3 + dx.
    ones_row : (1, S) ones, appended as the bias column driver.
    W        : image width (static Python int).
    """
    S = x.shape[1]
    pieces = []
    for dy in range(3):
        for dx in range(3):
            oy, ox = dy - 1, dx - 1
            off = oy * W + ox
            if off == 0:
                pieces.append(x)  # centre tap: no shift, mask is all-ones
            else:
                # out[p] = x[p + off] (mod S); wrapped/out-of-image positions
                # are zeroed by the boundary mask.
                shifted = pltpu.roll(x, shift=(-off) % S, axis=1)
                pieces.append(shifted * masks[dy * 3 + dx])
    pieces.append(ones_row)  # bias driver row (k = 9*C)
    return jnp.concatenate(pieces, axis=0)  # (9*C + 1, S)


def res_block_kernel(x_ref, mask_ref, a1_ref, w2_ref, o_ref, *, W, c_mid):
    # x_ref   : (1, C_in, S)                    flattened input (one batch elem)
    # mask_ref: (9, 1, S)                       3x3 boundary masks (shared)
    # a1_ref  : (C_mid + C_out, 9*C_in + 1)     [conv1 taps | b1] stacked over
    #                                           [1x1 skip (centre tap) | 0]
    # w2_ref  : (C_out, 9*C_mid + 1)            [conv2 taps | b2]
    # o_ref   : (1, C_out, S)                   lane-dense output (S = H*W)
    x = x_ref[0]           # (C_in, S)
    masks = mask_ref[...]  # (9, 1, S)
    S = x.shape[1]
    ones_row = jnp.ones((1, S), jnp.float32)

    # conv1 (3x3, pad=1, +bias) and the 1x1 skip as ONE matmul:
    #   (C_mid + C_out, 9*C_in + 1) x (9*C_in + 1, S) -> (C_mid + C_out, S)
    patches1 = _im2col(x, masks, ones_row, W)
    pre = jnp.dot(a1_ref[...], patches1, preferred_element_type=jnp.float32)
    h = jnp.maximum(pre[:c_mid], 0.0)   # (C_mid, S), bias already folded; ReLU
    skip = pre[c_mid:]                  # (C_out, S), no bias / no ReLU

    # conv2 (3x3, pad=1, +bias): (C_out, 9*C_mid+1) x (9*C_mid+1, S) -> (C_out, S)
    patches2 = _im2col(h, masks, ones_row, W)
    acc2 = jnp.dot(w2_ref[...], patches2, preferred_element_type=jnp.float32)
    main = jnp.maximum(acc2, 0.0)       # ReLU (is_last=False)

    o_ref[0] = (main + skip).astype(o_ref.dtype)


def _make_tap_masks(H, W):
    """(9, 1, H*W) 0/1 masks: mask[t, 0, i*W+j] == ((i+oy, j+ox) in-bounds)."""
    iy = jnp.arange(H)[:, None]
    jx = jnp.arange(W)[None, :]
    masks = []
    for dy in range(3):
        for dx in range(3):
            oy, ox = dy - 1, dx - 1
            ok = ((iy + oy >= 0) & (iy + oy < H) &
                  (jx + ox >= 0) & (jx + ox < W))
            masks.append(ok.reshape(1, H * W))
    return jnp.stack(masks, axis=0).astype(jnp.float32)


@jax.jit
def residual_block(x_nchw, w1, b1, w2, b2, w_skip):
    """x_nchw: (N, C_in, H, W) float32. Weights in PyTorch OIHW layout.
    Returns (N, C_out, H, W)."""
    N, C_in, H, W = x_nchw.shape
    C_mid = w1.shape[0]
    C_out = w2.shape[0]
    S = H * W

    # NCHW -> (N, C_in, H*W): pure reshape (no transpose / pad / extra HBM pass).
    x_flat = x_nchw.reshape(N, C_in, S).astype(jnp.float32)

    # OIHW -> (O, 9*I) with K index k = (dy*3 + dx)*I + i  (matches _im2col).
    w1_mat = jnp.transpose(w1, (0, 2, 3, 1)).reshape(C_mid, 9 * C_in)
    w1_mat = w1_mat.astype(jnp.float32)
    w2_mat = jnp.transpose(w2, (0, 2, 3, 1)).reshape(C_out, 9 * C_mid)
    w2_mat = w2_mat.astype(jnp.float32)
    ws_mat = w_skip[:, :, 0, 0].astype(jnp.float32)  # (C_out, C_in)

    # Fold the bias-free 1x1 skip into the conv1 matmul: it only reads the
    # centre tap (dy = dx = 1), i.e. K columns [4*C_in, 5*C_in).
    skip_rows = jnp.zeros((C_out, 9 * C_in), jnp.float32)
    skip_rows = skip_rows.at[:, 4 * C_in:5 * C_in].set(ws_mat)

    # Fold the conv biases into the matmuls via an extra "ones" column
    # (k = 9*C). The skip rows get 0 there (1x1 skip has no bias).
    a1 = jnp.concatenate(
        [jnp.concatenate([w1_mat, b1.reshape(C_mid, 1).astype(jnp.float32)],
                         axis=1),
         jnp.concatenate([skip_rows, jnp.zeros((C_out, 1), jnp.float32)],
                         axis=1)],
        axis=0)                                              # (C_mid+C_out, 9*C_in+1)
    w2_aug = jnp.concatenate(
        [w2_mat, b2.reshape(C_out, 1).astype(jnp.float32)], axis=1)  # (C_out, 9*C_mid+1)

    masks = _make_tap_masks(H, W)

    kernel = functools.partial(res_block_kernel, W=W, c_mid=C_mid)

    out_flat = pl.pallas_call(
        kernel,
        out_shape=jax.ShapeDtypeStruct((N, C_out, S), jnp.float32),
        grid_spec=pltpu.PrefetchScalarGridSpec(
            num_scalar_prefetch=0,
            grid=(N,),
            in_specs=[
                pl.BlockSpec((1, C_in, S), lambda n: (n, 0, 0)),
                pl.BlockSpec((9, 1, S), lambda n: (0, 0, 0)),
                pl.BlockSpec((C_mid + C_out, 9 * C_in + 1), lambda n: (0, 0)),
                pl.BlockSpec((C_out, 9 * C_mid + 1), lambda n: (0, 0)),
            ],
            out_specs=pl.BlockSpec((1, C_out, S), lambda n: (n, 0, 0)),
        ),
        compiler_params=pltpu.CompilerParams(
            dimension_semantics=("parallel",)),
    )(x_flat, masks, a1, w2_aug)

    # (N, C_out, H*W) -> NCHW (free reshape, matches PyTorch output layout).
    return out_flat.reshape(N, C_out, H, W)


def _reference(x_nchw, w1, b1, w2, b2, w_skip):
    """Plain-JAX reference (lax.conv) for sanity checking."""
    dn = ("NCHW", "OIHW", "NCHW")
    h = lax.conv_general_dilated(x_nchw, w1, (1, 1), ((1, 1), (1, 1)),
                                 dimension_numbers=dn)
    h = jnp.maximum(h + b1[None, :, None, None], 0.0)
    h = lax.conv_general_dilated(h, w2, (1, 1), ((1, 1), (1, 1)),
                                 dimension_numbers=dn)
    h = jnp.maximum(h + b2[None, :, None, None], 0.0)
    s = lax.conv_general_dilated(x_nchw, w_skip, (1, 1), ((0, 0), (0, 0)),
                                 dimension_numbers=dn)
    return h + s


if __name__ == "__main__":
    key = jax.random.PRNGKey(0)
    k_x, k_w1, k_b1, k_w2, k_b2, k_ws = jax.random.split(key, 6)

    N, C_in, C_mid, C_out, H, W = 2, 4, 8, 8, 16, 16

    x = jax.random.normal(k_x, (N, C_in, H, W), jnp.float32)
    w1 = jax.random.normal(k_w1, (C_mid, C_in, 3, 3), jnp.float32) * 0.1
    b1 = jax.random.normal(k_b1, (C_mid,), jnp.float32) * 0.1
    w2 = jax.random.normal(k_w2, (C_out, C_mid, 3, 3), jnp.float32) * 0.1
    b2 = jax.random.normal(k_b2, (C_out,), jnp.float32) * 0.1
    w_skip = jax.random.normal(k_ws, (C_out, C_in, 1, 1), jnp.float32) * 0.1

    out = residual_block(x, w1, b1, w2, b2, w_skip)
    out = jax.block_until_ready(out)

    ref = _reference(x, w1, b1, w2, b2, w_skip)
    assert out.shape == (N, C_out, H, W)
    assert jnp.max(jnp.abs(out - ref)) < 1e-4

    print("KERNEL_OK")
</pallas_src>

<mosaic_0001>
module attributes {stable_mosaic.version = 11 : i64} {
  func.func @res_block_kernel(%arg0: i32, %arg1: memref<1x4x256xf32, #tpu.memory_space<vmem>>, %arg2: memref<9x1x256xf32, #tpu.memory_space<vmem>>, %arg3: memref<16x37xf32, #tpu.memory_space<vmem>>, %arg4: memref<8x73xf32, #tpu.memory_space<vmem>>, %arg5: memref<1x8x256xf32, #tpu.memory_space<vmem>>) attributes {dimension_semantics = [#tpu.dimension_semantics<parallel>], iteration_bounds = array<i64: 2>, scalar_prefetch = 0 : i64, scratch_operands = 0 : i64, tpu.core_type = #tpu.core_type<tc>, window_params = [{transform_indices = @transform_0, window_bounds = array<i64: 1, 4, 256>}, {pipeline_mode = #tpu.pipeline_mode<synchronous>, transform_indices = @transform_1, window_bounds = array<i64: 9, 1, 256>}, {pipeline_mode = #tpu.pipeline_mode<synchronous>, transform_indices = @transform_2, window_bounds = array<i64: 16, 37>}, {pipeline_mode = #tpu.pipeline_mode<synchronous>, transform_indices = @transform_3, window_bounds = array<i64: 8, 73>}, {transform_indices = @transform_4, window_bounds = array<i64: 1, 8, 256>}]} {
    %c0 = arith.constant 0 : index
    %c0_0 = arith.constant 0 : index
    %c0_1 = arith.constant 0 : index
    %0 = vector.load %arg1[%c0, %c0_0, %c0_1] : memref<1x4x256xf32, #tpu.memory_space<vmem>>, vector<1x4x256xf32>
    %1 = vector.shape_cast %0 : vector<1x4x256xf32> to vector<4x256xf32>
    %c0_2 = arith.constant 0 : index
    %c0_3 = arith.constant 0 : index
    %c0_4 = arith.constant 0 : index
    %2 = vector.load %arg2[%c0_2, %c0_3, %c0_4] : memref<9x1x256xf32, #tpu.memory_space<vmem>>, vector<9x1x256xf32>
    %cst = arith.constant 1.000000e+00 : f32
    %3 = vector.broadcast %cst : f32 to vector<1x256xf32>
    %c17_i32 = arith.constant 17 : i32
    %4 = tpu.dynamic_rotate %1 by %c17_i32 dim 1 : vector<4x256xf32>, i32 -> vector<4x256xf32>
    %5 = vector.extract_strided_slice %2 {offsets = [0, 0, 0], sizes = [1, 1, 256], strides = [1, 1, 1]} : vector<9x1x256xf32> to vector<1x1x256xf32>
    %6 = vector.shape_cast %5 : vector<1x1x256xf32> to vector<1x256xf32>
    %7 = vector.broadcast %6 : vector<1x256xf32> to vector<4x256xf32>
    %8 = arith.mulf %4, %7 : vector<4x256xf32>
    %c16_i32 = arith.constant 16 : i32
    %9 = tpu.dynamic_rotate %1 by %c16_i32 dim 1 : vector<4x256xf32>, i32 -> vector<4x256xf32>
    %10 = vector.extract_strided_slice %2 {offsets = [1, 0, 0], sizes = [1, 1, 256], strides = [1, 1, 1]} : vector<9x1x256xf32> to vector<1x1x256xf32>
    %11 = vector.shape_cast %10 : vector<1x1x256xf32> to vector<1x256xf32>
    %12 = vector.broadcast %11 : vector<1x256xf32> to vector<4x256xf32>
    %13 = arith.mulf %9, %12 : vector<4x256xf32>
    %c15_i32 = arith.constant 15 : i32
    %14 = tpu.dynamic_rotate %1 by %c15_i32 dim 1 : vector<4x256xf32>, i32 -> vector<4x256xf32>
    %15 = vector.extract_strided_slice %2 {offsets = [2, 0, 0], sizes = [1, 1, 256], strides = [1, 1, 1]} : vector<9x1x256xf32> to vector<1x1x256xf32>
    %16 = vector.shape_cast %15 : vector<1x1x256xf32> to vector<1x256xf32>
    %17 = vector.broadcast %16 : vector<1x256xf32> to vector<4x256xf32>
    %18 = arith.mulf %14, %17 : vector<4x256xf32>
    %c1_i32 = arith.constant 1 : i32
    %19 = tpu.dynamic_rotate %1 by %c1_i32 dim 1 : vector<4x256xf32>, i32 -> vector<4x256xf32>
    %20 = vector.extract_strided_slice %2 {offsets = [3, 0, 0], sizes = [1, 1, 256], strides = [1, 1, 1]} : vector<9x1x256xf32> to vector<1x1x256xf32>
    %21 = vector.shape_cast %20 : vector<1x1x256xf32> to vector<1x256xf32>
    %22 = vector.broadcast %21 : vector<1x256xf32> to vector<4x256xf32>
    %23 = arith.mulf %19, %22 : vector<4x256xf32>
    %c255_i32 = arith.constant 255 : i32
    %24 = tpu.dynamic_rotate %1 by %c255_i32 dim 1 : vector<4x256xf32>, i32 -> vector<4x256xf32>
    %25 = vector.extract_strided_slice %2 {offsets = [5, 0, 0], sizes = [1, 1, 256], strides = [1, 1, 1]} : vector<9x1x256xf32> to vector<1x1x256xf32>
    %26 = vector.shape_cast %25 : vector<1x1x256xf32> to vector<1x256xf32>
    %27 = vector.broadcast %26 : vector<1x256xf32> to vector<4x256xf32>
    %28 = arith.mulf %24, %27 : vector<4x256xf32>
    %c241_i32 = arith.constant 241 : i32
    %29 = tpu.dynamic_rotate %1 by %c241_i32 dim 1 : vector<4x256xf32>, i32 -> vector<4x256xf32>
    %30 = vector.extract_strided_slice %2 {offsets = [6, 0, 0], sizes = [1, 1, 256], strides = [1, 1, 1]} : vector<9x1x256xf32> to vector<1x1x256xf32>
    %31 = vector.shape_cast %30 : vector<1x1x256xf32> to vector<1x256xf32>
    %32 = vector.broadcast %31 : vector<1x256xf32> to vector<4x256xf32>
    %33 = arith.mulf %29, %32 : vector<4x256xf32>
    %c240_i32 = arith.constant 240 : i32
    %34 = tpu.dynamic_rotate %1 by %c240_i32 dim 1 : vector<4x256xf32>, i32 -> vector<4x256xf32>
    %35 = vector.extract_strided_slice %2 {offsets = [7, 0, 0], sizes = [1, 1, 256], strides = [1, 1, 1]} : vector<9x1x256xf32> to vector<1x1x256xf32>
    %36 = vector.shape_cast %35 : vector<1x1x256xf32> to vector<1x256xf32>
    %37 = vector.broadcast %36 : vector<1x256xf32> to vector<4x256xf32>
    %38 = arith.mulf %34, %37 : vector<4x256xf32>
    %c239_i32 = arith.constant 239 : i32
    %39 = tpu.dynamic_rotate %1 by %c239_i32 dim 1 : vector<4x256xf32>, i32 -> vector<4x256xf32>
    %40 = vector.extract_strided_slice %2 {offsets = [8, 0, 0], sizes = [1, 1, 256], strides = [1, 1, 1]} : vector<9x1x256xf32> to vector<1x1x256xf32>
    %41 = vector.shape_cast %40 : vector<1x1x256xf32> to vector<1x256xf32>
    %42 = vector.broadcast %41 : vector<1x256xf32> to vector<4x256xf32>
    %43 = arith.mulf %39, %42 : vector<4x256xf32>
    %44 = tpu.concatenate %8, %13, %18, %23, %1, %28, %33, %38, %43, %3 in 0 : vector<4x256xf32>, vector<4x256xf32>, vector<4x256xf32>, vector<4x256xf32>, vector<4x256xf32>, vector<4x256xf32>, vector<4x256xf32>, vector<4x256xf32>, vector<4x256xf32>, vector<1x256xf32> -> vector<37x256xf32>
    %c0_5 = arith.constant 0 : index
    %c0_6 = arith.constant 0 : index
    %45 = vector.load %arg3[%c0_5, %c0_6] : memref<16x37xf32, #tpu.memory_space<vmem>>, vector<16x37xf32>
    %cst_7 = arith.constant dense<0.000000e+00> : vector<16x256xf32>
    %46 = tpu.matmul %45, %44, %cst_7 {dimension_numbers = #tpu.dot_dimension_numbers<[1], [0], [0], [1], [0, 0, 1, 1], [], []>} : vector<16x37xf32>, vector<37x256xf32>, vector<16x256xf32> -> vector<16x256xf32>
    %47 = vector.extract_strided_slice %46 {offsets = [0, 0], sizes = [8, 256], strides = [1, 1]} : vector<16x256xf32> to vector<8x256xf32>
    %cst_8 = arith.constant 0.000000e+00 : f32
    %48 = vector.broadcast %cst_8 : f32 to vector<8x256xf32>
    %49 = arith.maximumf %47, %48 : vector<8x256xf32>
    %50 = vector.extract_strided_slice %46 {offsets = [8, 0], sizes = [8, 256], strides = [1, 1]} : vector<16x256xf32> to vector<8x256xf32>
    %c17_i32_9 = arith.constant 17 : i32
    %51 = tpu.dynamic_rotate %49 by %c17_i32_9 dim 1 : vector<8x256xf32>, i32 -> vector<8x256xf32>
    %52 = vector.extract_strided_slice %2 {offsets = [0, 0, 0], sizes = [1, 1, 256], strides = [1, 1, 1]} : vector<9x1x256xf32> to vector<1x1x256xf32>
    %53 = vector.shape_cast %52 : vector<1x1x256xf32> to vector<1x256xf32>
    %54 = vector.broadcast %53 : vector<1x256xf32> to vector<8x256xf32>
    %55 = arith.mulf %51, %54 : vector<8x256xf32>
    %c16_i32_10 = arith.constant 16 : i32
    %56 = tpu.dynamic_rotate %49 by %c16_i32_10 dim 1 : vector<8x256xf32>, i32 -> vector<8x256xf32>
    %57 = vector.extract_strided_slice %2 {offsets = [1, 0, 0], sizes = [1, 1, 256], strides = [1, 1, 1]} : vector<9x1x256xf32> to vector<1x1x256xf32>
    %58 = vector.shape_cast %57 : vector<1x1x256xf32> to vector<1x256xf32>
    %59 = vector.broadcast %58 : vector<1x256xf32> to vector<8x256xf32>
    %60 = arith.mulf %56, %59 : vector<8x256xf32>
    %c15_i32_11 = arith.constant 15 : i32
    %61 = tpu.dynamic_rotate %49 by %c15_i32_11 dim 1 : vector<8x256xf32>, i32 -> vector<8x256xf32>
    %62 = vector.extract_strided_slice %2 {offsets = [2, 0, 0], sizes = [1, 1, 256], strides = [1, 1, 1]} : vector<9x1x256xf32> to vector<1x1x256xf32>
    %63 = vector.shape_cast %62 : vector<1x1x256xf32> to vector<1x256xf32>
    %64 = vector.broadcast %63 : vector<1x256xf32> to vector<8x256xf32>
    %65 = arith.mulf %61, %64 : vector<8x256xf32>
    %c1_i32_12 = arith.constant 1 : i32
    %66 = tpu.dynamic_rotate %49 by %c1_i32_12 dim 1 : vector<8x256xf32>, i32 -> vector<8x256xf32>
    %67 = vector.extract_strided_slice %2 {offsets = [3, 0, 0], sizes = [1, 1, 256], strides = [1, 1, 1]} : vector<9x1x256xf32> to vector<1x1x256xf32>
    %68 = vector.shape_cast %67 : vector<1x1x256xf32> to vector<1x256xf32>
    %69 = vector.broadcast %68 : vector<1x256xf32> to vector<8x256xf32>
    %70 = arith.mulf %66, %69 : vector<8x256xf32>
    %c255_i32_13 = arith.constant 255 : i32
    %71 = tpu.dynamic_rotate %49 by %c255_i32_13 dim 1 : vector<8x256xf32>, i32 -> vector<8x256xf32>
    %72 = vector.extract_strided_slice %2 {offsets = [5, 0, 0], sizes = [1, 1, 256], strides = [1, 1, 1]} : vector<9x1x256xf32> to vector<1x1x256xf32>
    %73 = vector.shape_cast %72 : vector<1x1x256xf32> to vector<1x256xf32>
    %74 = vector.broadcast %73 : vector<1x256xf32> to vector<8x256xf32>
    %75 = arith.mulf %71, %74 : vector<8x256xf32>
    %c241_i32_14 = arith.constant 241 : i32
    %76 = tpu.dynamic_rotate %49 by %c241_i32_14 dim 1 : vector<8x256xf32>, i32 -> vector<8x256xf32>
    %77 = vector.extract_strided_slice %2 {offsets = [6, 0, 0], sizes = [1, 1, 256], strides = [1, 1, 1]} : vector<9x1x256xf32> to vector<1x1x256xf32>
    %78 = vector.shape_cast %77 : vector<1x1x256xf32> to vector<1x256xf32>
    %79 = vector.broadcast %78 : vector<1x256xf32> to vector<8x256xf32>
    %80 = arith.mulf %76, %79 : vector<8x256xf32>
    %c240_i32_15 = arith.constant 240 : i32
    %81 = tpu.dynamic_rotate %49 by %c240_i32_15 dim 1 : vector<8x256xf32>, i32 -> vector<8x256xf32>
    %82 = vector.extract_strided_slice %2 {offsets = [7, 0, 0], sizes = [1, 1, 256], strides = [1, 1, 1]} : vector<9x1x256xf32> to vector<1x1x256xf32>
    %83 = vector.shape_cast %82 : vector<1x1x256xf32> to vector<1x256xf32>
    %84 = vector.broadcast %83 : vector<1x256xf32> to vector<8x256xf32>
    %85 = arith.mulf %81, %84 : vector<8x256xf32>
    %c239_i32_16 = arith.constant 239 : i32
    %86 = tpu.dynamic_rotate %49 by %c239_i32_16 dim 1 : vector<8x256xf32>, i32 -> vector<8x256xf32>
    %87 = vector.extract_strided_slice %2 {offsets = [8, 0, 0], sizes = [1, 1, 256], strides = [1, 1, 1]} : vector<9x1x256xf32> to vector<1x1x256xf32>
    %88 = vector.shape_cast %87 : vector<1x1x256xf32> to vector<1x256xf32>
    %89 = vector.broadcast %88 : vector<1x256xf32> to vector<8x256xf32>
    %90 = arith.mulf %86, %89 : vector<8x256xf32>
    %91 = tpu.concatenate %55, %60, %65, %70, %49, %75, %80, %85, %90, %3 in 0 : vector<8x256xf32>, vector<8x256xf32>, vector<8x256xf32>, vector<8x256xf32>, vector<8x256xf32>, vector<8x256xf32>, vector<8x256xf32>, vector<8x256xf32>, vector<8x256xf32>, vector<1x256xf32> -> vector<73x256xf32>
    %c0_17 = arith.constant 0 : index
    %c0_18 = arith.constant 0 : index
    %92 = vector.load %arg4[%c0_17, %c0_18] : memref<8x73xf32, #tpu.memory_space<vmem>>, vector<8x73xf32>
    %cst_19 = arith.constant dense<0.000000e+00> : vector<8x256xf32>
    %93 = tpu.matmul %92, %91, %cst_19 {dimension_numbers = #tpu.dot_dimension_numbers<[1], [0], [0], [1], [0, 0, 1, 1], [], []>} : vector<8x73xf32>, vector<73x256xf32>, vector<8x256xf32> -> vector<8x256xf32>
    %cst_20 = arith.constant 0.000000e+00 : f32
    %94 = vector.broadcast %cst_20 : f32 to vector<8x256xf32>
    %95 = arith.maximumf %93, %94 : vector<8x256xf32>
    %96 = arith.addf %95, %50 : vector<8x256xf32>
    %c0_21 = arith.constant 0 : index
    %c0_22 = arith.constant 0 : index
    %c0_23 = arith.constant 0 : index
    %97 = vector.load %arg5[%c0_21, %c0_22, %c0_23] : memref<1x8x256xf32, #tpu.memory_space<vmem>>, vector<1x8x256xf32>
    %98 = vector.shape_cast %97 : vector<1x8x256xf32> to vector<8x256xf32>
    %99 = vector.shape_cast %96 : vector<8x256xf32> to vector<1x8x256xf32>
    tpu.vector_store %arg5[%c0_21, %c0_22, %c0_23], %99 {strides = array<i32>} : memref<1x8x256xf32, #tpu.memory_space<vmem>>, vector<1x8x256xf32>,
    return
  }
  func.func @transform_0(%arg0: i32) -> (i32, i32, i32) {
    %c0_i32 = arith.constant 0 : i32
    %c0_i32_0 = arith.constant 0 : i32
    %c0_i32_1 = arith.constant 0 : i32
    return %arg0, %c0_i32, %c0_i32_0 : i32, i32, i32
  }
  func.func @transform_1(%arg0: i32) -> (i32, i32, i32) {
    %c0_i32 = arith.constant 0 : i32
    %c0_i32_0 = arith.constant 0 : i32
    %c0_i32_1 = arith.constant 0 : i32
    %c0_i32_2 = arith.constant 0 : i32
    return %c0_i32, %c0_i32_0, %c0_i32_1 : i32, i32, i32
  }
  func.func @transform_2(%arg0: i32) -> (i32, i32) {
    %c0_i32 = arith.constant 0 : i32
    %c0_i32_0 = arith.constant 0 : i32
    %c0_i32_1 = arith.constant 0 : i32
    return %c0_i32, %c0_i32_0 : i32, i32
  }
  func.func @transform_3(%arg0: i32) -> (i32, i32) {
    %c0_i32 = arith.constant 0 : i32
    %c0_i32_0 = arith.constant 0 : i32
    %c0_i32_1 = arith.constant 0 : i32
    return %c0_i32, %c0_i32_0 : i32, i32
  }
  func.func @transform_4(%arg0: i32) -> (i32, i32, i32) {
    %c0_i32 = arith.constant 0 : i32
    %c0_i32_0 = arith.constant 0 : i32
    %c0_i32_1 = arith.constant 0 : i32
    return %arg0, %c0_i32, %c0_i32_0 : i32, i32, i32
  }
}

</mosaic_0001>

<llo_original>
// kernel: residual_block.1
$region0: #{residual_block.1}
  #allocation0 [shape = 'u32[]', space=smem, size = 0x4, offset = 0x4, fixed_abs, tag = 'smem constant byte address 0x4 - core index']
  #allocation1 [shape = 'u32[144,128]{1,0:T(1,128)}', space=vmem, size = 0x12000, scoped, tag = 'internal scratch']
  %s0 = inlined_call_operand.vmem [shape: f32[2,4,256], index: 0, kind: input, shape index: {}]
  %s1 = inlined_call_operand.vmem [shape: f32[9,1,256], index: 1, kind: input, shape index: {}]
  %s2 = inlined_call_operand.vmem [shape: f32[16,37], index: 2, kind: input, shape index: {}]
  %s3 = inlined_call_operand.vmem [shape: f32[8,73], index: 3, kind: input, shape index: {}]
  %s4 = inlined_call_operand.vmem [shape: f32[2,8,256], index: 4, kind: output, shape index: {}]
  %s5 = sld [smem:[#allocation0]]
  $region49: #{residual_block.1} parent=0
    _
  %s7 = ssub.s32 1, %s5
  %s8 = scalar_select 0, %s7, %s5
  loop: start=0, step=1, limit=4
  $region2: #{residual_block.1} parent=0 // loop_pre_header
    _
  $region3: #{residual_block.1} parent=0 // loop_header
    %s10 = sphi 0, %s14
    %p11 = scmp.ge.s32.totalorder %s10, 4
    %s20 = sphi 0, %s22
    %s23 = sphi 0, %s20
    %s24 = sphi 0, %s23
    %s40 = sphi 0, %s24
    %s44 = sphi 0, %s44
    %s46 = sphi 0, %s44
    %s47 = sphi 0, %s46
    %s61 = sphi 0, %s47
    %s65 = sphi 0, %s65
    %s67 = sphi 0, %s65
    %s68 = sphi 0, %s67
    %s82 = sphi 0, %s68
    %s86 = sphi 0, %s86
    %s88 = sphi 0, %s86
    %s89 = sphi 0, %s88
    %s103 = sphi 0, %s89
    %s109 = sphi 0, %s111
    %s112 = sphi 0, %s109
    %s113 = sphi 0, %s112
    %s129 = sphi 0, %s113
  $region4: #{residual_block.1} parent=0 // loop_header_branch
    %13 = sbr.rel (%p11) target = $region8
  $region5: #{residual_block.1} parent=0 // loop_body
    %s15 = ssub.s32 %s10, 1
    %s16 = ssub.s32 %s10, 2
    %s17 = sadd.s32 %s10, 1
    %s18 = ssub.s32 %s10, %s17
    %p19 = scmp.eq.s32.totalorder %s18, 0
    %s21 = sadd.s32 %s20, 1
    %s22 = scalar_select %p19, %s20, %s21
    %p25 = pneg %p19
    %p26 = scmp.eq.s32.totalorder %s10, 1
    %p27 = por %p25, %p26
    %p28 = scmp.ne.s32.totalorder %s20, %s23
    %p29 = scmp.eq.s32.totalorder %s10, 0
    %p30 = por %p28, %p29
    %p31 = scmp.ne.s32.totalorder %s20, %s23
    %p32 = scmp.eq.s32.totalorder %s15, 1
    %p33 = por %p31, %p32
    %p34 = scmp.ne.s32.totalorder %s23, %s24
    %p35 = scmp.eq.s32.totalorder %s15, 0
    %p36 = por %p34, %p35
    %p37 = scmp.ne.s32.totalorder %s23, %s24
    %p38 = scmp.eq.s32.totalorder %s16, 1
    %p39 = por %p37, %p38
    %p41 = scmp.ne.s32.totalorder %s24, %s40
    %p42 = scmp.eq.s32.totalorder %s16, 0
    %p43 = por %p41, %p42
    %s45 = sadd.s32 %s44, 1
    %p48 = scmp.eq.s32.totalorder %s10, 1
    %p49 = scmp.ne.s32.totalorder %s44, %s46
    %p50 = scmp.eq.s32.totalorder %s10, 0
    %p51 = por %p49, %p50
    %p52 = scmp.ne.s32.totalorder %s44, %s46
    %p53 = scmp.eq.s32.totalorder %s15, 1
    %p54 = por %p52, %p53
    %p55 = scmp.ne.s32.totalorder %s46, %s47
    %p56 = scmp.eq.s32.totalorder %s15, 0
    %p57 = por %p55, %p56
    %p58 = scmp.ne.s32.totalorder %s46, %s47
    %p59 = scmp.eq.s32.totalorder %s16, 1
    %p60 = por %p58, %p59
    %p62 = scmp.ne.s32.totalorder %s47, %s61
    %p63 = scmp.eq.s32.totalorder %s16, 0
    %p64 = por %p62, %p63
    %s66 = sadd.s32 %s65, 1
    %p69 = scmp.eq.s32.totalorder %s10, 1
    %p70 = scmp.ne.s32.totalorder %s65, %s67
    %p71 = scmp.eq.s32.totalorder %s10, 0
    %p72 = por %p70, %p71
    %p73 = scmp.ne.s32.totalorder %s65, %s67
    %p74 = scmp.eq.s32.totalorder %s15, 1
    %p75 = por %p73, %p74
    %p76 = scmp.ne.s32.totalorder %s67, %s68
    %p77 = scmp.eq.s32.totalorder %s15, 0
    %p78 = por %p76, %p77
    %p79 = scmp.ne.s32.totalorder %s67, %s68
    %p80 = scmp.eq.s32.totalorder %s16, 1
    %p81 = por %p79, %p80
    %p83 = scmp.ne.s32.totalorder %s68, %s82
    %p84 = scmp.eq.s32.totalorder %s16, 0
    %p85 = por %p83, %p84
    %s87 = sadd.s32 %s86, 1
    %p90 = scmp.eq.s32.totalorder %s10, 1
    %p91 = scmp.ne.s32.totalorder %s86, %s88
    %p92 = scmp.eq.s32.totalorder %s10, 0
    %p93 = por %p91, %p92
    %p94 = scmp.ne.s32.totalorder %s86, %s88
    %p95 = scmp.eq.s32.totalorder %s15, 1
    %p96 = por %p94, %p95
    %p97 = scmp.ne.s32.totalorder %s88, %s89
    %p98 = scmp.eq.s32.totalorder %s15, 0
    %p99 = por %p97, %p98
    %p100 = scmp.ne.s32.totalorder %s88, %s89
    %p101 = scmp.eq.s32.totalorder %s16, 1
    %p102 = por %p100, %p101
    %p104 = scmp.ne.s32.totalorder %s89, %s103
    %p105 = scmp.eq.s32.totalorder %s16, 0
    %p106 = por %p104, %p105
    %s107 = ssub.s32 %s10, %s17
    %p108 = scmp.eq.s32.totalorder %s107, 0
    %s110 = sadd.s32 %s109, 1
    %s111 = scalar_select %p108, %s109, %s110
    %p114 = pneg %p108
    %p115 = scmp.eq.s32.totalorder %s10, 1
    %p116 = por %p114, %p115
    %p117 = scmp.ne.s32.totalorder %s109, %s112
    %p118 = scmp.eq.s32.totalorder %s10, 0
    %p119 = por %p117, %p118
    %p120 = scmp.ne.s32.totalorder %s109, %s112
    %p121 = scmp.eq.s32.totalorder %s15, 1
    %p122 = por %p120, %p121
    %p123 = scmp.ne.s32.totalorder %s112, %s113
    %p124 = scmp.eq.s32.totalorder %s15, 0
    %p125 = por %p123, %p124
    %p126 = scmp.ne.s32.totalorder %s112, %s113
    %p127 = scmp.eq.s32.totalorder %s16, 1
    %p128 = por %p126, %p127
    %p130 = scmp.ne.s32.totalorder %s113, %s129
    %p131 = scmp.eq.s32.totalorder %s16, 0
    %p132 = por %p130, %p131
    %p133 = scmp.le.s32.totalorder 1, %s10
    %p134 = scmp.lt.s32.totalorder %s10, 3
    %p135 = pnand %p133, %p134
    %p136 = pneg %p135
    // Predicated region
    $region9: #{residual_block.1} parent=5 // pred_check
      _
    $region10: #{residual_block.1} parent=5 // pred_check_branch
      %138 = sbr.rel (%p135) target = $region12
    $region11: #{residual_block.1} parent=5 // pred_region
      %s139 = ssub.s32 %s10, 1
      // Predicated region
      $region13: #{residual_block.1} parent=11 // pred_check
        %p140 = pneg %p57
      $region14: #{residual_block.1} parent=11 // pred_check_branch
        %142 = sbr.rel (%p140) target = $region16
      $region15: #{residual_block.1} parent=11 // pred_region
        _
      $region16: #{residual_block.1} parent=11 // pred_fallthru
        _
      // Predicated region
      $region17: #{residual_block.1} parent=11 // pred_check
        %p143 = pneg %p78
      $region18: #{residual_block.1} parent=11 // pred_check_branch
        %145 = sbr.rel (%p143) target = $region20
      $region19: #{residual_block.1} parent=11 // pred_region
        _
      $region20: #{residual_block.1} parent=11 // pred_fallthru
        _
      // Predicated region
      $region21: #{residual_block.1} parent=11 // pred_check
        %p146 = pneg %p99
      $region22: #{residual_block.1} parent=11 // pred_check_branch
        %148 = sbr.rel (%p146) target = $region24
      $region23: #{residual_block.1} parent=11 // pred_region
        _
      $region24: #{residual_block.1} parent=11 // pred_fallthru
        _
    $region12: #{residual_block.1} parent=5 // pred_fallthru
      _
    %p149 = scmp.lt.s32.totalorder %s10, 2
    // Predicated region
    $region25: #{residual_block.1} parent=5 // pred_check
      %p150 = pneg %p149
    $region26: #{residual_block.1} parent=5 // pred_check_branch
      %152 = sbr.rel (%p150) target = $region28
    $region27: #{residual_block.1} parent=5 // pred_region
      // Predicated region
      $region29: #{residual_block.1} parent=27 // pred_check
        %p153 = pneg %p30
      $region30: #{residual_block.1} parent=27 // pred_check_branch
        %155 = sbr.rel (%p153) target = $region32
      $region31: #{residual_block.1} parent=27 // pred_region
        %p156 = scmp.lt.s32.totalorder %s10, 1
        %s157 = scalar_select %p156, %s10, 1
        %s158 = smul.addr %s157, 2
        %s159 = smul.addr %s158, 4
        %s160 = scalar_lea.vmem %s0, %s159
      $region32: #{residual_block.1} parent=27 // pred_fallthru
        _
    $region28: #{residual_block.1} parent=5 // pred_fallthru
      _
    %p161 = scmp.le.s32.totalorder 1, %s10
    %p162 = scmp.lt.s32.totalorder %s10, 3
    %p163 = pnand %p161, %p162
    %p164 = pneg %p163
    // Predicated region
    $region33: #{residual_block.1} parent=5 // pred_check
      _
    $region34: #{residual_block.1} parent=5 // pred_check_branch
      %166 = sbr.rel (%p163) target = $region36
    $region35: #{residual_block.1} parent=5 // pred_region
      %s167 = ssub.s32 %s10, 1
      %p168 = scmp.lt.s32.totalorder %s15, 1
      %s169 = scalar_select %p168, %s15, 1
      %s170 = smul.addr %s169, 2
      %s171 = smul.addr %s170, 4
      %s172 = scalar_lea.vmem %s0, %s171
      %p173 = pneg %p36
      %p174 = pneg %p33
      %p175 = pneg %p57
      %p176 = pneg %p54
      %p177 = pneg %p78
      %p178 = pneg %p75
      %p179 = pneg %p99
      %p180 = pneg %p96
      %p181 = pneg %p125
      %p182 = pneg %p122
      %p183 = scmp.lt.s32.totalorder %s15, 1
      %s184 = scalar_select %p183, %s15, 1
      %s185 = smul.addr %s184, 2
      %s186 = smul.addr %s185, 8
      %s187 = scalar_lea.vmem %s4, %s186
      %p188 = scmp.lt.s32.totalorder %s15, 1
      %s189 = scalar_select %p188, %s15, 1
      %s190 = smul.addr %s189, 2
      %s191 = smul.addr %s190, 4
      %s192 = scalar_lea.vmem %s0, %s191
      %p193 = scmp.lt.s32.totalorder %s15, 1
      %s194 = scalar_select %p193, %s15, 1
      %s195 = smul.addr %s194, 2
      %s196 = smul.addr %s195, 8
      %s197 = scalar_lea.vmem %s4, %s196
      %v198 = vld [vmem:[%s192] sm:$0xff]
      %v199 = vld [vmem:[%s1] sm:$0x3]
      %v200 = vld [vmem:[%s1 + $0x2] sm:$0x3]
      %v201 = vld [vmem:[%s1 + $0x4] sm:$0x3]
      %v202 = vld [vmem:[%s1 + $0x6] sm:$0x3]
      %v203 = vld [vmem:[%s1 + $0xa] sm:$0x3]
      %v204 = vld [vmem:[%s1 + $0xc] sm:$0x3]
      %v205 = vld [vmem:[%s1 + $0xe] sm:$0x3]
      %v206 = vld [vmem:[%s1 + $0x10] sm:$0x3]
      %v208 = vcombine.high %v198, %v198
      %210 = vrot.lane.b32.xlu0 %v198, 17
      %v211 = vpop.permute.xlu0 %210
      %212 = vrot.lane.b32.xlu0 %v208, 17
      %v213 = vpop.permute.xlu0 %212
      %v214 = vlaneseq
      %v215 = vand.u32 %v214, 127
      %vm216 = vcmp.lt.s32.totalorder %v215, 17
      %v217 = vsel %vm216, %v211, %v213
      %v218 = vsel %vm216, %v213, %v211
      %v220 = vlaneseq
      %v221 = vshrl.u32 %v220, 7
      %v222 = vsub.s32 0, %v221
      %v223 = vrot.slane %v199, %v222
      %v224 = vlaneseq
      %v225 = vshrl.u32 %v224, 7
      %v226 = vsub.s32 1, %v225
      %v227 = vrot.slane %v199, %v226
      %v230 = vmul.f32 %v218, %v223
      %v231 = vmul.f32 %v217, %v227
      %232 = vrot.lane.b32.xlu0 %v198, 16
      %v233 = vpop.permute.xlu0 %232
      %234 = vrot.lane.b32.xlu0 %v208, 16
      %v235 = vpop.permute.xlu0 %234
      %vm236 = vcmp.lt.s32.totalorder %v215, 16
      %v237 = vsel %vm236, %v233, %v235
      %v238 = vsel %vm236, %v235, %v233
      %v240 = vlaneseq
      %v241 = vshrl.u32 %v240, 7
      %v242 = vsub.s32 0, %v241
      %v243 = vrot.slane %v200, %v242
      %v244 = vlaneseq
      %v245 = vshrl.u32 %v244, 7
      %v246 = vsub.s32 1, %v245
      %v247 = vrot.slane %v200, %v246
      %v250 = vmul.f32 %v238, %v243
      %v251 = vmul.f32 %v237, %v247
      %252 = vrot.lane.b32.xlu0 %v198, 15
      %v253 = vpop.permute.xlu0 %252
      %254 = vrot.lane.b32.xlu0 %v208, 15
      %v255 = vpop.permute.xlu0 %254
      %vm256 = vcmp.lt.s32.totalorder %v215, 15
      %v257 = vsel %vm256, %v253, %v255
      %v258 = vsel %vm256, %v255, %v253
      %v260 = vlaneseq
      %v261 = vshrl.u32 %v260, 7
      %v262 = vsub.s32 0, %v261
      %v263 = vrot.slane %v201, %v262
      %v264 = vlaneseq
      %v265 = vshrl.u32 %v264, 7
      %v266 = vsub.s32 1, %v265
      %v267 = vrot.slane %v201, %v266
      %v270 = vmul.f32 %v258, %v263
      %v271 = vmul.f32 %v257, %v267
      %272 = vrot.lane.b32.xlu0 %v198, 1
      %v273 = vpop.permute.xlu0 %272
      %274 = vrot.lane.b32.xlu0 %v208, 1
      %v275 = vpop.permute.xlu0 %274
      %vm276 = vcmp.lt.s32.totalorder %v215, 1
      %v277 = vsel %vm276, %v273, %v275
      %v278 = vsel %vm276, %v275, %v273
      %v280 = vlaneseq
      %v281 = vshrl.u32 %v280, 7
      %v282 = vsub.s32 0, %v281
      %v283 = vrot.slane %v202, %v282
      %v284 = vlaneseq
      %v285 = vshrl.u32 %v284, 7
      %v286 = vsub.s32 1, %v285
      %v287 = vrot.slane %v202, %v286
      %v290 = vmul.f32 %v278, %v283
      %v291 = vmul.f32 %v277, %v287
      %292 = vrot.lane.b32.xlu0 %v198, 127
      %v293 = vpop.permute.xlu0 %292
      %294 = vrot.lane.b32.xlu0 %v208, 127
      %v295 = vpop.permute.xlu0 %294
      %vm296 = vcmp.lt.s32.totalorder %v215, 127
      %v297 = vsel %vm296, %v293, %v295
      %v298 = vsel %vm296, %v295, %v293
      %v300 = vlaneseq
      %v301 = vshrl.u32 %v300, 7
      %v302 = vsub.s32 0, %v301
      %v303 = vrot.slane %v203, %v302
      %v304 = vlaneseq
      %v305 = vshrl.u32 %v304, 7
      %v306 = vsub.s32 1, %v305
      %v307 = vrot.slane %v203, %v306
      %v310 = vmul.f32 %v297, %v303
      %v311 = vmul.f32 %v298, %v307
      %312 = vrot.lane.b32.xlu0 %v198, 113
      %v313 = vpop.permute.xlu0 %312
      %314 = vrot.lane.b32.xlu0 %v208, 113
      %v315 = vpop.permute.xlu0 %314
      %vm316 = vcmp.lt.s32.totalorder %v215, 113
      %v317 = vsel %vm316, %v313, %v315
      %v318 = vsel %vm316, %v315, %v313
      %v320 = vlaneseq
      %v321 = vshrl.u32 %v320, 7
      %v322 = vsub.s32 0, %v321
      %v323 = vrot.slane %v204, %v322
      %v324 = vlaneseq
      %v325 = vshrl.u32 %v324, 7
      %v326 = vsub.s32 1, %v325
      %v327 = vrot.slane %v204, %v326
      %v330 = vmul.f32 %v317, %v323
      %v331 = vmul.f32 %v318, %v327
      %332 = vrot.lane.b32.xlu0 %v198, 112
      %v333 = vpop.permute.xlu0 %332
      %334 = vrot.lane.b32.xlu0 %v208, 112
      %v335 = vpop.permute.xlu0 %334
      %vm336 = vcmp.lt.s32.totalorder %v215, 112
      %v337 = vsel %vm336, %v333, %v335
      %v338 = vsel %vm336, %v335, %v333
      %v340 = vlaneseq
      %v341 = vshrl.u32 %v340, 7
      %v342 = vsub.s32 0, %v341
      %v343 = vrot.slane %v205, %v342
      %v344 = vlaneseq
      %v345 = vshrl.u32 %v344, 7
      %v346 = vsub.s32 1, %v345
      %v347 = vrot.slane %v205, %v346
      %v350 = vmul.f32 %v337, %v343
      %v351 = vmul.f32 %v338, %v347
      %352 = vrot.lane.b32.xlu0 %v198, 111
      %v353 = vpop.permute.xlu0 %352
      %354 = vrot.lane.b32.xlu0 %v208, 111
      %v355 = vpop.permute.xlu0 %354
      %vm356 = vcmp.lt.s32.totalorder %v215, 111
      %v357 = vsel %vm356, %v353, %v355
      %v358 = vsel %vm356, %v355, %v353
      %v360 = vlaneseq
      %v361 = vshrl.u32 %v360, 7
      %v362 = vsub.s32 0, %v361
      %v363 = vrot.slane %v206, %v362
      %v364 = vlaneseq
      %v365 = vshrl.u32 %v364, 7
      %v366 = vsub.s32 1, %v365
      %v367 = vrot.slane %v206, %v366
      %v370 = vmul.f32 %v357, %v363
      %v371 = vmul.f32 %v358, %v367
      %v374 = vrot.slane %v250, 4
      %v375 = vrot.slane %v251, 4
      %v380 = vrot.slane %v290, 4
      %v381 = vrot.slane %v291, 4
      %v386 = vrot.slane %v310, 4
      %v387 = vrot.slane %v311, 4
      %v392 = vrot.slane %v350, 4
      %v393 = vrot.slane %v351, 4
      %vm396 = vcmask 1043456
      %v397 = vsel %vm396, %v230, %v374
      %v398 = vsel %vm396, %v231, %v375
      %v399 = vsel %vm396, %v270, %v380
      %v400 = vsel %vm396, %v271, %v381
      %v401 = vsel %vm396, %v198, %v386
      %v402 = vsel %vm396, %v208, %v387
      %v403 = vsel %vm396, %v330, %v392
      %v404 = vsel %vm396, %v331, %v393
      %v405 = vsel %vm396, %v370, 1.0
      %v406 = vsel %vm396, %v371, 1.0
      %v407 = vld [vmem:[%s2] sm:$0xff]
      %v408 = vld [vmem:[%s2 + $0x8] sm:$0xff]
      %vm409 = vcmask 302080
      %v411 = vsel %vm409, %v407, 0
      %v414 = vsel %vm409, %v408, 0
      %vm416 = vcmask 1044480
      %v418 = vsel %vm416, %v405, 0
      %v421 = vsel %vm416, %v406, 0
      %423 = vmatprep.subr.mxu0 %v398
      %424 = vmatpush1.msra.mxu0 %v397
      %425 = vmatprep.subr.mxu0 %v400
      %426 = vmatpush1.msra.mxu0 %v399
      %427 = vmatprep.subr.mxu0 %v402
      %428 = vmatpush1.msra.mxu0 %v401
      %429 = vmatprep.subr.mxu0 %v404
      %430 = vmatpush1.msra.mxu0 %v403
      %431 = vmatprep.subr.mxu0 %v421
      %432 = vmatpush1.msra.mxu0 %v418
      %433 = vmatprep.subr.mxu0 0.0
      %434 = vmatpush1.msra.mxu0 0.0
      %435 = vmatprep.subr.mxu0 0.0
      %436 = vmatpush1.msra.mxu0 0.0
      %437 = vmatprep.subr.mxu0 0.0
      %438 = vmatpush1.msra.mxu0 0.0
      %439 = vmatprep.subr.mxu0 0.0
      %440 = vmatpush1.msra.mxu0 0.0
      %441 = vmatprep.subr.mxu0 0.0
      %442 = vmatpush1.msra.mxu0 0.0
      %443 = vmatprep.subr.mxu0 0.0
      %444 = vmatpush1.msra.mxu0 0.0
      %445 = vmatprep.subr.mxu0 0.0
      %446 = vmatpush1.msra.mxu0 0.0
      %447 = vmatprep.subr.mxu0 0.0
      %448 = vmatpush1.msra.mxu0 0.0
      %449 = vmatprep.subr.mxu0 0.0
      %450 = vmatpush1.msra.mxu0 0.0
      %451 = vmatprep.subr.mxu0 0.0
      %452 = vmatpush1.msra.mxu0 0.0
      %453 = vmatprep.subr.mxu0 0.0
      %454 = vmatpush1.msra.mxu0 0.0
      %455 = vmatprep.subr.mxu0 0.0
      %456 = vmatpush1.msra.mxu0 0.0
      %457 = vmatprep.subr.mxu0 0.0
      %458 = vmatpush1.msra.mxu0 0.0
      %459 = vmatprep.subr.mxu0 0.0
      %460 = vmatpush1.msra.mxu0 0.0
      %461 = vmatprep.subr.mxu0 0.0
      %462 = vmatpush1.msra.mxu0 0.0
      %463 = vmatprep.subr.mxu0 0.0
      %464 = vmatpush1.msra.mxu0 0.0
      %465 = vmatprep.subr.mxu0 0.0
      %466 = vmatpush1.msra.mxu0 0.0
      %467 = vmatprep.subr.mxu0 0.0
      %468 = vmatpush1.msra.mxu0 0.0
      %469 = vmatprep.subr.mxu0 0.0
      %470 = vmatpush1.msra.mxu0 0.0
      %471 = vmatprep.subr.mxu0 0.0
      %472 = vmatpush1.msra.mxu0 0.0
      %473 = vmatprep.subr.mxu0 0.0
      %474 = vmatpush1.msra.mxu0 0.0
      %475 = vmatprep.subr.mxu0 0.0
      %476 = vmatpush1.msra.mxu0 0.0
      %477 = vmatprep.subr.mxu0 0.0
      %478 = vmatpush1.msra.mxu0 0.0
      %479 = vmatprep.subr.mxu0 0.0
      %480 = vmatpush1.msra.mxu0 0.0
      %481 = vmatprep.subr.mxu0 0.0
      %482 = vmatpush1.msra.mxu0 0.0
      %483 = vmatprep.subr.mxu0 0.0
      %484 = vmatpush1.msra.mxu0 0.0
      %485 = vmatprep.subr.mxu0 0.0
      %486 = vmatpush1.msra.mxu0 0.0
      %487 = vmatprep.mubr.f32.mxu0 0.0
      %488 = vmatmul.mubr.f32.gmra.mrb[0].mxu0 %v411
      %v489 = vpop.f32.mrb[0].mxu0
      %v490 = vadd.f32 0.0, %v489
      %v491 = vpop.f32.mrb[0].mxu0
      %v492 = vadd.f32 0.0, %v491
      %493 = vmatprep.mubr.f32.mxu0 0.0
      %494 = vmatmul.mubr.f32.gmra.mrb[0].mxu0 %v414
      %v495 = vpop.f32.mrb[0].mxu0
      %v496 = vadd.f32 0.0, %v495
      %v497 = vpop.f32.mrb[0].mxu0
      %v498 = vadd.f32 0.0, %v497
      %499 = vdwg.mxu0
      %v500 = vmax.f32 %v490, 0.0
      %v501 = vmax.f32 %v492, 0.0
      %502 = vrot.lane.b32.xlu0 %v500, 17
      %v503 = vpop.permute.xlu0 %502
      %504 = vrot.lane.b32.xlu0 %v501, 17
      %v505 = vpop.permute.xlu0 %504
      %v506 = vsel %vm216, %v503, %v505
      %v507 = vsel %vm216, %v505, %v503
      %v508 = vmul.f32 %v507, %v223
      %v509 = vmul.f32 %v506, %v227
      %510 = vrot.lane.b32.xlu0 %v500, 16
      %v511 = vpop.permute.xlu0 %510
      %512 = vrot.lane.b32.xlu0 %v501, 16
      %v513 = vpop.permute.xlu0 %512
      %v514 = vsel %vm236, %v511, %v513
      %v515 = vsel %vm236, %v513, %v511
      %v516 = vmul.f32 %v515, %v243
      %v517 = vmul.f32 %v514, %v247
      %518 = vrot.lane.b32.xlu0 %v500, 15
      %v519 = vpop.permute.xlu0 %518
      %520 = vrot.lane.b32.xlu0 %v501, 15
      %v521 = vpop.permute.xlu0 %520
      %v522 = vsel %vm256, %v519, %v521
      %v523 = vsel %vm256, %v521, %v519
      %v524 = vmul.f32 %v523, %v263
      %v525 = vmul.f32 %v522, %v267
      %526 = vrot.lane.b32.xlu0 %v500, 1
      %v527 = vpop.permute.xlu0 %526
      %528 = vrot.lane.b32.xlu0 %v501, 1
      %v529 = vpop.permute.xlu0 %528
      %v530 = vsel %vm276, %v527, %v529
      %v531 = vsel %vm276, %v529, %v527
      %v532 = vmul.f32 %v531, %v283
      %v533 = vmul.f32 %v530, %v287
      %534 = vrot.lane.b32.xlu0 %v500, 127
      %v535 = vpop.permute.xlu0 %534
      %536 = vrot.lane.b32.xlu0 %v501, 127
      %v537 = vpop.permute.xlu0 %536
      %v538 = vsel %vm296, %v535, %v537
      %v539 = vsel %vm296, %v537, %v535
      %v540 = vmul.f32 %v538, %v303
      %v541 = vmul.f32 %v539, %v307
      %542 = vrot.lane.b32.xlu0 %v500, 113
      %v543 = vpop.permute.xlu0 %542
      %544 = vrot.lane.b32.xlu0 %v501, 113
      %v545 = vpop.permute.xlu0 %544
      %v546 = vsel %vm316, %v543, %v545
      %v547 = vsel %vm316, %v545, %v543
      %v548 = vmul.f32 %v546, %v323
      %v549 = vmul.f32 %v547, %v327
      %550 = vrot.lane.b32.xlu0 %v500, 112
      %v551 = vpop.permute.xlu0 %550
      %552 = vrot.lane.b32.xlu0 %v501, 112
      %v553 = vpop.permute.xlu0 %552
      %v554 = vsel %vm336, %v551, %v553
      %v555 = vsel %vm336, %v553, %v551
      %v556 = vmul.f32 %v554, %v343
      %v557 = vmul.f32 %v555, %v347
      %558 = vrot.lane.b32.xlu0 %v500, 111
      %v559 = vpop.permute.xlu0 %558
      %560 = vrot.lane.b32.xlu0 %v501, 111
      %v561 = vpop.permute.xlu0 %560
      %v562 = vsel %vm356, %v559, %v561
      %v563 = vsel %vm356, %v561, %v559
      %v564 = vmul.f32 %v562, %v363
      %v565 = vmul.f32 %v563, %v367
      %v566 = vld [vmem:[%s3] sm:$0xff]
      %vm567 = vcmask 596992
      %v569 = vsel %vm567, %v566, 0
      %vm571 = vcmask 1040384
      %v573 = vsel %vm571, 1.0, 0
      %575 = vmatprep.subr.mxu0 %v509
      %576 = vmatpush1.msra.mxu0 %v508
      %577 = vmatprep.subr.mxu0 %v517
      %578 = vmatpush1.msra.mxu0 %v516
      %579 = vmatprep.subr.mxu0 %v525
      %580 = vmatpush1.msra.mxu0 %v524
      %581 = vmatprep.subr.mxu0 %v533
      %582 = vmatpush1.msra.mxu0 %v532
      %583 = vmatprep.subr.mxu0 %v501
      %584 = vmatpush1.msra.mxu0 %v500
      %585 = vmatprep.subr.mxu0 %v541
      %586 = vmatpush1.msra.mxu0 %v540
      %587 = vmatprep.subr.mxu0 %v549
      %588 = vmatpush1.msra.mxu0 %v548
      %589 = vmatprep.subr.mxu0 %v557
      %590 = vmatpush1.msra.mxu0 %v556
      %591 = vmatprep.subr.mxu0 %v565
      %592 = vmatpush1.msra.mxu0 %v564
      %593 = vmatprep.subr.mxu0 %v573
      %594 = vmatpush1.msra.mxu0 %v573
      %595 = vmatprep.subr.mxu0 0.0
      %596 = vmatpush1.msra.mxu0 0.0
      %597 = vmatprep.subr.mxu0 0.0
      %598 = vmatpush1.msra.mxu0 0.0
      %599 = vmatprep.subr.mxu0 0.0
      %600 = vmatpush1.msra.mxu0 0.0
      %601 = vmatprep.subr.mxu0 0.0
      %602 = vmatpush1.msra.mxu0 0.0
      %603 = vmatprep.subr.mxu0 0.0
      %604 = vmatpush1.msra.mxu0 0.0
      %605 = vmatprep.subr.mxu0 0.0
      %606 = vmatpush1.msra.mxu0 0.0
      %607 = vmatprep.subr.mxu0 0.0
      %608 = vmatpush1.msra.mxu0 0.0
      %609 = vmatprep.subr.mxu0 0.0
      %610 = vmatpush1.msra.mxu0 0.0
      %611 = vmatprep.subr.mxu0 0.0
      %612 = vmatpush1.msra.mxu0 0.0
      %613 = vmatprep.subr.mxu0 0.0
      %614 = vmatpush1.msra.mxu0 0.0
      %615 = vmatprep.subr.mxu0 0.0
      %616 = vmatpush1.msra.mxu0 0.0
      %617 = vmatprep.subr.mxu0 0.0
      %618 = vmatpush1.msra.mxu0 0.0
      %619 = vmatprep.subr.mxu0 0.0
      %620 = vmatpush1.msra.mxu0 0.0
      %621 = vmatprep.subr.mxu0 0.0
      %622 = vmatpush1.msra.mxu0 0.0
      %623 = vmatprep.subr.mxu0 0.0
      %624 = vmatpush1.msra.mxu0 0.0
      %625 = vmatprep.subr.mxu0 0.0
      %626 = vmatpush1.msra.mxu0 0.0
      %627 = vmatprep.subr.mxu0 0.0
      %628 = vmatpush1.msra.mxu0 0.0
      %629 = vmatprep.subr.mxu0 0.0
      %630 = vmatpush1.msra.mxu0 0.0
      %631 = vmatprep.subr.mxu0 0.0
      %632 = vmatpush1.msra.mxu0 0.0
      %633 = vmatprep.subr.mxu0 0.0
      %634 = vmatpush1.msra.mxu0 0.0
      %635 = vmatprep.subr.mxu0 0.0
      %636 = vmatpush1.msra.mxu0 0.0
      %637 = vmatprep.subr.mxu0 0.0
      %638 = vmatpush1.msra.mxu0 0.0
      %639 = vmatprep.mubr.f32.mxu0 0.0
      %640 = vmatmul.mubr.f32.gmra.mrb[0].mxu0 %v569
      %v641 = vpop.f32.mrb[0].mxu0
      %v642 = vadd.f32 0.0, %v641
      %v643 = vpop.f32.mrb[0].mxu0
      %v644 = vadd.f32 0.0, %v643
      %645 = vdwg.mxu0
      %v646 = vmax.f32 %v642, 0.0
      %v647 = vmax.f32 %v644, 0.0
      %v648 = vadd.f32 %v646, %v496
      %v649 = vadd.f32 %v647, %v498
      %650 = vst [vmem:[%s197] sm:$0xff] %v648
      %651 = vst [vmem:[%s197 + $0x8] sm:$0xff] %v649
      %p652 = scmp.lt.s32.totalorder %s15, 1
      %s653 = scalar_select %p652, %s15, 1
      %s654 = smul.addr %s653, 2
      %s655 = smul.addr %s654, 8
      %s656 = scalar_lea.vmem %s4, %s655
      // Predicated region
      $region37: #{residual_block.1} parent=35 // pred_check
        %p657 = pneg %p122
      $region38: #{residual_block.1} parent=35 // pred_check_branch
        %659 = sbr.rel (%p657) target = $region40
      $region39: #{residual_block.1} parent=35 // pred_region
        _
      $region40: #{residual_block.1} parent=35 // pred_fallthru
        _
    $region36: #{residual_block.1} parent=5 // pred_fallthru
      _
    %p660 = scmp.le.s32.totalorder 2, %s10
    // Predicated region
    $region41: #{residual_block.1} parent=5 // pred_check
      %p661 = pneg %p660
    $region42: #{residual_block.1} parent=5 // pred_check_branch
      %663 = sbr.rel (%p661) target = $region44
    $region43: #{residual_block.1} parent=5 // pred_region
      %s664 = ssub.s32 %s10, 2
      // Predicated region
      $region45: #{residual_block.1} parent=43 // pred_check
        %p665 = pneg %p128
      $region46: #{residual_block.1} parent=43 // pred_check_branch
        %667 = sbr.rel (%p665) target = $region48
      $region47: #{residual_block.1} parent=43 // pred_region
        %p668 = scmp.lt.s32.totalorder %s16, 1
        %s669 = scalar_select %p668, %s16, 1
        %s670 = smul.addr %s669, 2
        %s671 = smul.addr %s670, 8
        %s672 = scalar_lea.vmem %s4, %s671
      $region48: #{residual_block.1} parent=43 // pred_fallthru
        _
    $region44: #{residual_block.1} parent=5 // pred_fallthru
      _
  $region6: #{residual_block.1} parent=0 // loop_footer
    %s14 = sadd.s32 1, %s10
  $region7: #{residual_block.1} parent=0 // loop_footer_branch
    %9 = sbr.rel target = $region3
  $region8: #{residual_block.1} parent=0 // loop_exit
    _

</llo_original>
